<compile_context>
chip_gen: v5e
topology: v5e:2x2
jax: 0.10.0
libtpu: 0.0.40
codegen_flags: <defaults>
</compile_context>

<pallas_src>
import functools

import jax
import jax.numpy as jnp
import numpy as np
from jax.experimental import pallas as pl
from jax.experimental.pallas import tpu as pltpu


def _rope_half_cache_kernel(inv_freq_ref, fold_ref, cos_ref, sin_ref, *, k_fold):
    """Writes one (tile_s, width) tile of the folded half-dim cos/sin tables.

    inv_freq_ref: (1, width) f32, inv_freq tiled k_fold times along lanes.
    fold_ref:     (1, width) f32, lane -> fold index (c // half_dim), 0..k_fold-1.
    cos_ref/sin_ref: (tile_s, width) output tiles.
    Column c of folded row r holds position (tile_start + r)*k_fold + (c//half_dim)
    and frequency index c % half_dim.
    """
    tile_s = cos_ref.shape[0]

    # Per-row base position: small (tile_s, 1) int column, exact in f32 (< 2^24).
    row = jax.lax.broadcasted_iota(jnp.int32, (tile_s, 1), 0)
    base_pos = pl.program_id(0) * (tile_s * k_fold)
    row_pos = (base_pos + row * k_fold).astype(jnp.float32)          # (tile_s, 1)

    # Two broadcasted full-tile f32 ops; pos is an exact integer in f32, so the
    # single-rounded product matches the reference t * inv_freq bit-for-bit.
    pos = row_pos + fold_ref[...]                                    # (tile_s, width)
    freqs = pos * inv_freq_ref[...]

    # One unmasked full-width store per output (cast only at the store).
    cos_ref[...] = jnp.cos(freqs).astype(cos_ref.dtype)
    sin_ref[...] = jnp.sin(freqs).astype(sin_ref.dtype)


def _round_up(x, m):
    return ((x + m - 1) // m) * m


def _tensorcores_per_device():
    """Best-effort TC-per-device count; only v7x has 2. Failure => 1."""
    try:
        dev = jax.devices()[0]
        if dev.platform != "tpu":
            return 1
        kind = str(getattr(dev, "device_kind", "")).lower()
        if "v7" in kind:
            return 2
        nc = getattr(dev, "num_cores", None)
        if isinstance(nc, int) and 1 <= nc <= 8:
            return nc
    except Exception:
        pass
    return 1


def build_rope_cache(dim, max_seq_len, inv_freq, cache_dtype=jnp.float32):
    """Build (1, 1, max_seq_len, dim) rotary cos/sin tables with one Pallas call."""
    assert dim % 2 == 0, "rotary dim must be even"
    half_dim = dim // 2
    inv_freq = jnp.asarray(inv_freq, jnp.float32).reshape(half_dim)

    # Fold K positions per output row so the last axis is a dense 128 lanes.
    k_fold = 128 // half_dim if (half_dim < 128 and 128 % half_dim == 0) else 1
    width = k_fold * half_dim

    itemsize = np.dtype(cache_dtype).itemsize
    pack = 32 // itemsize                      # sublane pack depth: f32->8, bf16->16, i8->32
    folded_rows = _round_up(pl.cdiv(max_seq_len, k_fold), pack)

    # Tile budget: 2 outputs x 2 pipeline buffers x tile bytes <= ~12 MiB
    # (v5e default scoped VMEM is 16 MiB; v6e/v7x have more headroom).
    bytes_per_row = width * itemsize
    max_tile = max(((12 * 1024 * 1024) // (4 * bytes_per_row)) // pack * pack, pack)
    max_tile = min(max_tile, 4096)             # diminishing returns past this

    n_cores = _tensorcores_per_device()
    if n_cores > 1 and folded_rows >= 2 * pack:
        # >= n_cores grid steps so each TensorCore takes a share (v7x).
        tile_s = min(_round_up(pl.cdiv(folded_rows, n_cores), pack), max_tile)
    else:
        # Single TensorCore: one full-size tile when it fits (no pointless split).
        tile_s = min(folded_rows, max_tile)
    grid = pl.cdiv(folded_rows, tile_s)        # ragged last block handled by Pallas

    # Tiny per-lane constants (512 B each); DMA fully hidden by the pipeline.
    inv_freq_row = jnp.tile(inv_freq[None, :], (1, k_fold))                           # (1, width)
    fold_off = jnp.repeat(jnp.arange(k_fold, dtype=jnp.float32), half_dim)[None, :]   # (1, width)

    kernel = functools.partial(_rope_half_cache_kernel, k_fold=k_fold)
    small_spec = pl.BlockSpec((1, width), lambda i: (0, 0))
    out_spec = pl.BlockSpec((tile_s, width), lambda i: (i, 0))

    def _launch(dim_sem):
        return pl.pallas_call(
            kernel,
            out_shape=(jax.ShapeDtypeStruct((folded_rows, width), cache_dtype),
                       jax.ShapeDtypeStruct((folded_rows, width), cache_dtype)),
            grid=(grid,),
            in_specs=[small_spec, small_spec],
            out_specs=[out_spec, out_spec],
            compiler_params=pltpu.CompilerParams(dimension_semantics=dim_sem),
        )(inv_freq_row, fold_off)

    if n_cores > 1 and grid >= 2:
        core_par = getattr(pltpu, "CORE_PARALLEL", "parallel")
        try:
            cos_h, sin_h = _launch((core_par,))
        except Exception:
            # Fall back if core-parallel semantics are rejected on this chip.
            cos_h, sin_h = _launch(("arbitrary",))
    else:
        cos_h, sin_h = _launch(("arbitrary",))

    # Unfold: row-major reshape (rows, K*half) -> (rows*K, half) is contiguous,
    # then duplicate the identical halves once (emb = cat(freqs, freqs)).
    cos_half = cos_h.reshape(folded_rows * k_fold, half_dim)[:max_seq_len]
    sin_half = sin_h.reshape(folded_rows * k_fold, half_dim)[:max_seq_len]
    cos = jnp.concatenate([cos_half, cos_half], axis=-1)[None, None]
    sin = jnp.concatenate([sin_half, sin_half], axis=-1)[None, None]
    return cos, sin


class SmolLM2RotaryEmbeddingPallas:
    """JAX/Pallas equivalent of the PyTorch SmolLM2RotaryEmbedding module.

    cache_dtype defaults to float32 (PyTorch default dtype parity); pass the
    model compute dtype (e.g. jnp.bfloat16) to make the per-forward cast a
    no-op and halve the cache's HBM footprint.
    """

    def __init__(self, dim, max_position_embeddings=2048, base=10000,
                 cache_dtype=jnp.float32):
        self.dim = dim
        self.base = float(base)
        self.cache_dtype = cache_dtype
        # Exact inv_freq (same values as the PyTorch buffer); fed to the kernel.
        self.inv_freq = 1.0 / (
            self.base ** (jnp.arange(0, dim, 2, dtype=jnp.float32) / dim))
        self.max_seq_len_cached = max_position_embeddings
        self.cos_cached, self.sin_cached = build_rope_cache(
            dim, self.max_seq_len_cached, self.inv_freq, cache_dtype)

    def __call__(self, x, seq_len=None):
        if seq_len is None:
            seq_len = x.shape[-2]
        if seq_len > self.max_seq_len_cached:
            # TODO(synk): Python-level cache growth (mirrors the PyTorch
            # register_buffer branch); it will not retrigger under jax.jit.
            self.max_seq_len_cached = seq_len
            self.cos_cached, self.sin_cached = build_rope_cache(
                self.dim, self.max_seq_len_cached, self.inv_freq, self.cache_dtype)
        cos = self.cos_cached[:, :, :seq_len, :]
        sin = self.sin_cached[:, :, :seq_len, :]
        if cos.dtype != x.dtype:
            cos = cos.astype(x.dtype)
            sin = sin.astype(x.dtype)
        return cos, sin


def _reference(dim, base, seq_len, dtype):
    inv_freq = 1.0 / (base ** (jnp.arange(0, dim, 2, dtype=jnp.float32) / dim))
    t = jnp.arange(seq_len, dtype=jnp.float32)
    freqs = jnp.einsum("i,j->ij", t, inv_freq)
    emb = jnp.concatenate([freqs, freqs], axis=-1)
    return (jnp.cos(emb)[None, None].astype(dtype),
            jnp.sin(emb)[None, None].astype(dtype))


if __name__ == "__main__":
    key = jax.random.PRNGKey(0)

    # Small shapes consistent with the module's usage.
    batch, n_heads, seq, head_dim = 2, 4, 8, 32
    max_pos = 128

    x = jax.random.normal(key, (batch, n_heads, seq, head_dim), dtype=jnp.float32)

    rope = SmolLM2RotaryEmbeddingPallas(
        dim=head_dim, max_position_embeddings=max_pos, base=10000)
    cos, sin = rope(x, seq_len=seq)
    cos, sin = jax.block_until_ready((cos, sin))

    cos_ref, sin_ref = _reference(head_dim, 10000, seq, x.dtype)
    assert cos.shape == (1, 1, seq, head_dim), cos.shape
    assert sin.shape == (1, 1, seq, head_dim), sin.shape
    assert jnp.allclose(cos, cos_ref, atol=1e-5, rtol=1e-5)
    assert jnp.allclose(sin, sin_ref, atol=1e-5, rtol=1e-5)

    # Check the full cache (positions up to max_pos-1).  The freqs product is
    # bit-identical to the reference; only the cos/sin polynomial lowering
    # (Mosaic vs XLA) can differ by a few ulps at larger arguments.
    cos_full, sin_full = rope(x, seq_len=max_pos)
    cos_full, sin_full = jax.block_until_ready((cos_full, sin_full))
    cos_fr, sin_fr = _reference(head_dim, 10000, max_pos, x.dtype)
    assert cos_full.shape == (1, 1, max_pos, head_dim), cos_full.shape
    assert jnp.allclose(cos_full, cos_fr, atol=1e-4, rtol=1e-4)
    assert jnp.allclose(sin_full, sin_fr, atol=1e-4, rtol=1e-4)

    print("KERNEL_OK")
</pallas_src>

<mosaic_0001>
module attributes {stable_mosaic.version = 11 : i64} {
  func.func @_rope_half_cache_kernel(%arg0: i32, %arg1: memref<1x128xf32, #tpu.memory_space<vmem>>, %arg2: memref<1x128xf32, #tpu.memory_space<vmem>>, %arg3: memref<16x128xf32, #tpu.memory_space<vmem>>, %arg4: memref<16x128xf32, #tpu.memory_space<vmem>>) attributes {dimension_semantics = [#tpu.dimension_semantics<arbitrary>], iteration_bounds = array<i64: 1>, scalar_prefetch = 0 : i64, scratch_operands = 0 : i64, tpu.core_type = #tpu.core_type<tc>, window_params = [{pipeline_mode = #tpu.pipeline_mode<synchronous>, transform_indices = @transform_0, window_bounds = array<i64: 1, 128>}, {pipeline_mode = #tpu.pipeline_mode<synchronous>, transform_indices = @transform_1, window_bounds = array<i64: 1, 128>}, {transform_indices = @transform_2, window_bounds = array<i64: 16, 128>}, {transform_indices = @transform_3, window_bounds = array<i64: 16, 128>}]} {
    %0 = tpu.iota {dimensions = array<i32: 0>} : vector<16x1xi32>
    %c128_i32 = arith.constant 128 : i32
    %1 = arith.muli %arg0, %c128_i32 : i32
    %c8_i32 = arith.constant 8 : i32
    %2 = vector.broadcast %c8_i32 : i32 to vector<16x1xi32>
    %3 = arith.muli %0, %2 : vector<16x1xi32>
    %4 = vector.broadcast %1 : i32 to vector<16x1xi32>
    %5 = arith.addi %4, %3 : vector<16x1xi32>
    %6 = arith.sitofp %5 : vector<16x1xi32> to vector<16x1xf32>
    %c0 = arith.constant 0 : index
    %c0_0 = arith.constant 0 : index
    %7 = vector.load %arg2[%c0, %c0_0] : memref<1x128xf32, #tpu.memory_space<vmem>>, vector<1x128xf32>
    %8 = vector.broadcast %6 : vector<16x1xf32> to vector<16x128xf32>
    %9 = vector.broadcast %7 : vector<1x128xf32> to vector<16x128xf32>
    %10 = arith.addf %8, %9 : vector<16x128xf32>
    %c0_1 = arith.constant 0 : index
    %c0_2 = arith.constant 0 : index
    %11 = vector.load %arg1[%c0_1, %c0_2] : memref<1x128xf32, #tpu.memory_space<vmem>>, vector<1x128xf32>
    %12 = vector.broadcast %11 : vector<1x128xf32> to vector<16x128xf32>
    %13 = arith.mulf %10, %12 : vector<16x128xf32>
    %14 = math.cos %13 : vector<16x128xf32>
    %c0_3 = arith.constant 0 : index
    %c0_4 = arith.constant 0 : index
    %15 = vector.load %arg3[%c0_3, %c0_4] : memref<16x128xf32, #tpu.memory_space<vmem>>, vector<16x128xf32>
    tpu.vector_store %arg3[%c0_3, %c0_4], %14 {strides = array<i32>} : memref<16x128xf32, #tpu.memory_space<vmem>>, vector<16x128xf32>,
    %16 = math.sin %13 : vector<16x128xf32>
    %c0_5 = arith.constant 0 : index
    %c0_6 = arith.constant 0 : index
    %17 = vector.load %arg4[%c0_5, %c0_6] : memref<16x128xf32, #tpu.memory_space<vmem>>, vector<16x128xf32>
    tpu.vector_store %arg4[%c0_5, %c0_6], %16 {strides = array<i32>} : memref<16x128xf32, #tpu.memory_space<vmem>>, vector<16x128xf32>,
    return
  }
  func.func @transform_0(%arg0: i32) -> (i32, i32) {
    %c0_i32 = arith.constant 0 : i32
    %c0_i32_0 = arith.constant 0 : i32
    %c0_i32_1 = arith.constant 0 : i32
    return %c0_i32, %c0_i32_0 : i32, i32
  }
  func.func @transform_1(%arg0: i32) -> (i32, i32) {
    %c0_i32 = arith.constant 0 : i32
    %c0_i32_0 = arith.constant 0 : i32
    %c0_i32_1 = arith.constant 0 : i32
    return %c0_i32, %c0_i32_0 : i32, i32
  }
  func.func @transform_2(%arg0: i32) -> (i32, i32) {
    %c0_i32 = arith.constant 0 : i32
    %c0_i32_0 = arith.constant 0 : i32
    return %arg0, %c0_i32 : i32, i32
  }
  func.func @transform_3(%arg0: i32) -> (i32, i32) {
    %c0_i32 = arith.constant 0 : i32
    %c0_i32_0 = arith.constant 0 : i32
    return %arg0, %c0_i32 : i32, i32
  }
}

</mosaic_0001>

<llo_original>
// kernel: tpu_custom_call.1
$region0: #{tpu_custom_call.1}
  #allocation0 [shape = 'u32[]', space=smem, size = 0x4, offset = 0x4, fixed_abs, tag = 'smem constant byte address 0x4 - core index']
  #allocation1 [shape = 'u32[72,128]{1,0:T(1,128)}', space=vmem, size = 0x9000, scoped, tag = 'internal scratch']
  %s0 = inlined_call_operand.hbm [shape: f32[1,128], index: 0, kind: input, shape index: {}]
  %s1 = inlined_call_operand.hbm [shape: f32[1,128], index: 1, kind: input, shape index: {}]
  %s2 = inlined_call_operand.hbm [shape: f32[16,128], index: 2, kind: output, shape index: {0}]
  %s3 = inlined_call_operand.hbm [shape: f32[16,128], index: 3, kind: output, shape index: {1}]
  %4 = xla_tuple %s2, %s3
  %s5 = sld [smem:[#allocation0]]
  $region34: #{tpu_custom_call.1} parent=0
    _
  %s7 = ssub.s32 1, %s5
  %s8 = scalar_select 0, %s7, %s5
  $region1: #{tpu_custom_call.1} parent=0
    #allocation2 [shape = 'u8[512]{0}', space=vmem, size = 0x400, scoped, tag = 'input window, operand 0, single buffered']
    #allocation3 [shape = 's32[1]{0}', space=sflag, size = 0x4, scoped, tag = 'scoped memory for tpu_custom_call.1']
    #allocation4 [shape = 's32[1]{0}', space=sflag, size = 0x4, scoped, tag = 'scoped memory for tpu_custom_call.1']
    #allocation5 [shape = 'u8[512]{0}', space=vmem, size = 0x400, scoped, tag = 'input window, operand 1, single buffered']
    #allocation6 [shape = 's32[1]{0}', space=sflag, size = 0x4, scoped, tag = 'scoped memory for tpu_custom_call.1']
    #allocation7 [shape = 'u8[8192]{0}', space=vmem, size = 0x2000, scoped, tag = 'output window, operand 0, single buffered']
    #allocation8 [shape = 'u8[8192]{0}', space=vmem, size = 0x2000, scoped, tag = 'output window, operand 1, single buffered']
    #allocation9 [shape = 's32[1]{0}', space=sflag, size = 0x4, scoped, tag = 'scoped memory for tpu_custom_call.1']
    %9 = vsyncpa [#allocation3], 0
    %10 = vsyncpa [#allocation6], 0
    %11 = vsyncpa [#allocation4], 0
    %12 = vsyncpa [#allocation9], 0
    // Predicated region
    $region2: #{tpu_custom_call.1} parent=1 // pred_check
      _
    $region3: #{tpu_custom_call.1} parent=1 // pred_check_branch
      %14 = sbr.rel (0) target = $region5
    $region4: #{tpu_custom_call.1} parent=1 // pred_region
      %16 = vsyncadd [#allocation3], 0
      %s18 = sshll.u32 %s0, 4
      %s19 = int_to_ptr.hbm [resolvable:$true] %s18
      %s20 = sshll.u32 [#allocation2], 4
      %s21 = int_to_ptr.vmem [resolvable:$true] %s20
      %23 = dma.hbm_to_vmem [thread:$0]  %s19, 16, %s21, [#allocation3]
    $region5: #{tpu_custom_call.1} parent=1 // pred_fallthru
      _
    // Predicated region
    $region6: #{tpu_custom_call.1} parent=1 // pred_check
      _
    $region7: #{tpu_custom_call.1} parent=1 // pred_check_branch
      %25 = sbr.rel (0) target = $region9
    $region8: #{tpu_custom_call.1} parent=1 // pred_region
      %27 = vsyncadd [#allocation6], 0
      %s29 = sshll.u32 %s1, 4
      %s30 = int_to_ptr.hbm [resolvable:$true] %s29
      %s31 = sshll.u32 [#allocation5], 4
      %s32 = int_to_ptr.vmem [resolvable:$true] %s31
      %34 = dma.hbm_to_vmem [thread:$0]  %s30, 16, %s32, [#allocation6]
    $region9: #{tpu_custom_call.1} parent=1 // pred_fallthru
      _
    // Predicated region
    $region10: #{tpu_custom_call.1} parent=1 // pred_check
      _
    $region11: #{tpu_custom_call.1} parent=1 // pred_check_branch
      %36 = sbr.rel (0) target = $region13
    $region12: #{tpu_custom_call.1} parent=1 // pred_region
      %38 = dma.done [#allocation3], 16
    $region13: #{tpu_custom_call.1} parent=1 // pred_fallthru
      _
    // Predicated region
    $region14: #{tpu_custom_call.1} parent=1 // pred_check
      _
    $region15: #{tpu_custom_call.1} parent=1 // pred_check_branch
      %40 = sbr.rel (0) target = $region17
    $region16: #{tpu_custom_call.1} parent=1 // pred_region
      %42 = dma.done [#allocation6], 16
    $region17: #{tpu_custom_call.1} parent=1 // pred_fallthru
      _
    %v43 = vlaneseq
    %v44 = vshrl.u32 %v43, 7
    %v45 = vadd.s32 %v44, 8
    %s46 = smul.u32 0, 128
    %v47 = vmul.u32 %v44, 8
    %v48 = vmul.u32 %v45, 8
    %v49 = vstv %s46
    %v50 = vadd.s32 %v49, %v47
    %v51 = vadd.s32 %v49, %v48
    %v52 = vcvt.s32.f32 %v50
    %v53 = vcvt.s32.f32 %v51
    %v54 = vld [vmem:[#allocation5] sm:$0x1]
    %v56 = vperm.slane %v54, 0
    %v58 = vadd.f32 %v52, %v56
    %v59 = vadd.f32 %v53, %v56
    %v60 = vld [vmem:[#allocation2] sm:$0x1]
    %v62 = vperm.slane %v60, 0
    %v64 = vmul.f32 %v58, %v62
    %v65 = vmul.f32 %v59, %v62
    %v66 = vand.u32 2147483647, %v64
    %vm67 = vcmp.le.f32.partialorder %v66, 0.7853982
    %vm68 = vcmp.lt.s32.totalorder %v64, 0
    %v69 = vand.u32 %v64, 2139095040
    %v70 = vshrl.u32 %v69, 23
    %v71 = vsub.s32 %v70, 127
    %v72 = vand.u32 2147483647, %v64
    %v73 = vand.u32 %v72, 8388607
    %v74 = vor.u32 %v73, 8388608
    %v75 = vsub.s32 0, %v74
    %v76 = vadd.s32 %v71, 1
    %vm77 = vcmp.gt.s32.totalorder %v76, 0
    %v78 = vsel %vm77, %v76, 0
    %v79 = vshrl.u32 %v78, 5
    %v80 = vand.u32 %v78, 31
    %v81 = vsub.s32 32, %v80
    %v82 = vshrl.u32 683565275, %v81
    %v83 = vshll.u32 683565275, %v80
    %v84 = vshrl.u32 2475754826, %v81
    %v85 = vor.u32 %v83, %v84
    %v86 = vshll.u32 2475754826, %v80
    %v87 = vshrl.u32 2131351028, %v81
    %v88 = vor.u32 %v86, %v87
    %v89 = vshll.u32 2131351028, %v80
    %v90 = vshrl.u32 2102212464, %v81
    %v91 = vor.u32 %v89, %v90
    %v92 = vshll.u32 2102212464, %v80
    %v93 = vshrl.u32 920167782, %v81
    %v94 = vor.u32 %v92, %v93
    %v95 = vshll.u32 920167782, %v80
    %v96 = vshrl.u32 1326507024, %v81
    %v97 = vor.u32 %v95, %v96
    %vm98 = vcmp.lt.s32.totalorder %v79, 1
    %vm99 = vcmp.lt.s32.totalorder %v79, 2
    %vm100 = vcmp.lt.s32.totalorder %v79, 3
    %vm101 = vcmp.lt.s32.totalorder %v79, 4
    %v102 = vsel %vm98, %v82, %v85
    %v103 = vsel %vm101, %v91, 2102212464
    %v104 = vsel %vm100, %v88, %v103
    %v105 = vsel %vm99, %v102, %v104
    %v106 = vsel %vm98, %v85, %v88
    %v107 = vsel %vm101, %v94, 920167782
    %v108 = vsel %vm100, %v91, %v107
    %v109 = vsel %vm99, %v106, %v108
    %v110 = vsel %vm98, %v88, %v91
    %v111 = vsel %vm101, %v97, 1326507024
    %v112 = vsel %vm100, %v94, %v111
    %v113 = vsel %vm99, %v110, %v112
    %v114 = vshll.u32 %v74, 8
    %v115 = vand.u32 %v114, 65535
    %v116 = vshrl.u32 %v114, 16
    %v117 = vand.u32 %v113, 65535
    %v118 = vshrl.u32 %v113, 16
    %v119 = vmul.u32 %v115, %v117
    %v120 = vmul.u32 %v115, %v118
    %v121 = vmul.u32 %v116, %v117
    %v122 = vmul.u32 %v116, %v118
    %v123 = vshll.u32 %v120, 16
    %v124 = vshrl.u32 %v120, 16
    %v125 = vshll.u32 %v121, 16
    %v126 = vshrl.u32 %v121, 16
    %vm127 = vc.u32 %v119, %v123
    %v128 = vsel %vm127, 1, 0
    %v129 = vadd.s32 %v119, %v123
    %v130 = vadd.s32 %v122, %v128
    %vm131 = vc.u32 %v129, %v125
    %v132 = vsel %vm131, 1, 0
    %v133 = vadd.s32 %v129, %v125
    %v134 = vadd.s32 %v130, %v132
    %v135 = vadd.s32 %v134, %v124
    %v136 = vadd.s32 %v135, %v126
    %v137 = vand.u32 %v114, 65535
    %v138 = vshrl.u32 %v114, 16
    %v139 = vand.u32 %v109, 65535
    %v140 = vshrl.u32 %v109, 16
    %v141 = vmul.u32 %v137, %v139
    %v142 = vmul.u32 %v137, %v140
    %v143 = vmul.u32 %v138, %v139
    %v144 = vmul.u32 %v138, %v140
    %v145 = vshll.u32 %v142, 16
    %v146 = vshrl.u32 %v142, 16
    %v147 = vshll.u32 %v143, 16
    %v148 = vshrl.u32 %v143, 16
    %vm149 = vc.u32 %v141, %v145
    %v150 = vsel %vm149, 1, 0
    %v151 = vadd.s32 %v141, %v145
    %v152 = vadd.s32 %v144, %v150
    %vm153 = vc.u32 %v151, %v147
    %v154 = vsel %vm153, 1, 0
    %v155 = vadd.s32 %v151, %v147
    %v156 = vadd.s32 %v152, %v154
    %v157 = vadd.s32 %v156, %v146
    %v158 = vadd.s32 %v157, %v148
    %v159 = vmul.u32 %v114, %v105
    %v160 = vadd.s32 %v136, %v155
    %vm161 = vc.u32 %v136, %v155
    %v162 = vadd.s32 %v158, 1
    %v163 = vsel %vm161, %v162, %v158
    %v164 = vadd.s32 %v159, %v163
    %v165 = vadd.s32 %v164, 536870912
    %v166 = vshrl.u32 %v165, 30
    %v167 = vshll.u32 %v166, 30
    %v168 = vsub.s32 %v164, %v167
    %vm169 = vcmp.lt.s32.totalorder %v168, 0
    %v170 = vsub.s32 0, %v168
    %v171 = vsel %vm169, %v170, %v168
    %v172 = vclz %v171
    %v173 = vsub.s32 %v172, 2
    %vm174 = vcmp.gt.s32.totalorder 0, %v173
    %v175 = vsel %vm174, 0, %v173
    %v176 = vsub.s32 32, %v175
    %v177 = vshll.u32 %v168, %v175
    %v178 = vshrl.u32 %v160, %v176
    %v179 = vor.u32 %v177, %v178
    %v180 = vsub.s32 4294967266, %v175
    %v181 = vadd.s32 %v180, 127
    %v182 = vshll.u32 %v181, 23
    %v183 = vor.u32 4788187, %v182
    %v184 = vand.u32 2147483647, %v183
    %v186 = vcvt.s32.f32 %v179
    %v187 = vmul.f32 %v186, %v184
    %v188 = vxor.u32 %v187, 2147483648
    %v189 = vsel %vm68, %v188, %v187
    %v190 = vsub.s32 4, %v166
    %v191 = vsel %vm68, %v190, %v166
    %v192 = vsel %vm67, %v64, %v189
    %v193 = vsel %vm67, 0, %v191
    %v194 = vmul.f32 %v192, %v192
    %v195 = vmul.f32 %v194, -0.001358992
    %v196 = vadd.f32 %v195, 0.041655596
    %v197 = vmul.f32 %v194, %v196
    %v198 = vadd.f32 %v197, -0.4999988
    %v199 = vmul.f32 %v194, %v198
    %v200 = vadd.f32 1.0, %v199
    %v201 = vmul.f32 %v192, %v192
    %v202 = vmul.f32 %v201, -0.00019511016
    %v203 = vadd.f32 %v202, 0.008332121
    %v204 = vmul.f32 %v201, %v203
    %v205 = vadd.f32 %v204, -0.16666654
    %v206 = vmul.f32 %v201, %v205
    %v207 = vadd.f32 %v206, 1.0
    %v208 = vmul.f32 %v207, %v192
    %vm209 = vweird.f32 %v64
    %v210 = vand.u32 %v193, 3
    %vm211 = vcmp.lt.s32.totalorder %v210, 2
    %vm212 = vcmp.eq.s32.totalorder %v210, 0
    %v213 = vxor.u32 %v208, 2147483648
    %v214 = vsel %vm212, %v200, %v213
    %vm215 = vcmp.eq.s32.totalorder %v210, 2
    %v216 = vxor.u32 %v200, 2147483648
    %v217 = vsel %vm215, %v216, %v208
    %v218 = vsel %vm211, %v214, %v217
    %v219 = vsel %vm209, nan, %v218
    %v220 = vand.u32 2147483647, %v65
    %vm221 = vcmp.le.f32.partialorder %v220, 0.7853982
    %vm222 = vcmp.lt.s32.totalorder %v65, 0
    %v223 = vand.u32 %v65, 2139095040
    %v224 = vshrl.u32 %v223, 23
    %v225 = vsub.s32 %v224, 127
    %v226 = vand.u32 2147483647, %v65
    %v227 = vand.u32 %v226, 8388607
    %v228 = vor.u32 %v227, 8388608
    %v229 = vsub.s32 0, %v228
    %v230 = vadd.s32 %v225, 1
    %vm231 = vcmp.gt.s32.totalorder %v230, 0
    %v232 = vsel %vm231, %v230, 0
    %v233 = vshrl.u32 %v232, 5
    %v234 = vand.u32 %v232, 31
    %v235 = vsub.s32 32, %v234
    %v236 = vshrl.u32 683565275, %v235
    %v237 = vshll.u32 683565275, %v234
    %v238 = vshrl.u32 2475754826, %v235
    %v239 = vor.u32 %v237, %v238
    %v240 = vshll.u32 2475754826, %v234
    %v241 = vshrl.u32 2131351028, %v235
    %v242 = vor.u32 %v240, %v241
    %v243 = vshll.u32 2131351028, %v234
    %v244 = vshrl.u32 2102212464, %v235
    %v245 = vor.u32 %v243, %v244
    %v246 = vshll.u32 2102212464, %v234
    %v247 = vshrl.u32 920167782, %v235
    %v248 = vor.u32 %v246, %v247
    %v249 = vshll.u32 920167782, %v234
    %v250 = vshrl.u32 1326507024, %v235
    %v251 = vor.u32 %v249, %v250
    %vm252 = vcmp.lt.s32.totalorder %v233, 1
    %vm253 = vcmp.lt.s32.totalorder %v233, 2
    %vm254 = vcmp.lt.s32.totalorder %v233, 3
    %vm255 = vcmp.lt.s32.totalorder %v233, 4
    %v256 = vsel %vm252, %v236, %v239
    %v257 = vsel %vm255, %v245, 2102212464
    %v258 = vsel %vm254, %v242, %v257
    %v259 = vsel %vm253, %v256, %v258
    %v260 = vsel %vm252, %v239, %v242
    %v261 = vsel %vm255, %v248, 920167782
    %v262 = vsel %vm254, %v245, %v261
    %v263 = vsel %vm253, %v260, %v262
    %v264 = vsel %vm252, %v242, %v245
    %v265 = vsel %vm255, %v251, 1326507024
    %v266 = vsel %vm254, %v248, %v265
    %v267 = vsel %vm253, %v264, %v266
    %v268 = vshll.u32 %v228, 8
    %v269 = vand.u32 %v268, 65535
    %v270 = vshrl.u32 %v268, 16
    %v271 = vand.u32 %v267, 65535
    %v272 = vshrl.u32 %v267, 16
    %v273 = vmul.u32 %v269, %v271
    %v274 = vmul.u32 %v269, %v272
    %v275 = vmul.u32 %v270, %v271
    %v276 = vmul.u32 %v270, %v272
    %v277 = vshll.u32 %v274, 16
    %v278 = vshrl.u32 %v274, 16
    %v279 = vshll.u32 %v275, 16
    %v280 = vshrl.u32 %v275, 16
    %vm281 = vc.u32 %v273, %v277
    %v282 = vsel %vm281, 1, 0
    %v283 = vadd.s32 %v273, %v277
    %v284 = vadd.s32 %v276, %v282
    %vm285 = vc.u32 %v283, %v279
    %v286 = vsel %vm285, 1, 0
    %v287 = vadd.s32 %v283, %v279
    %v288 = vadd.s32 %v284, %v286
    %v289 = vadd.s32 %v288, %v278
    %v290 = vadd.s32 %v289, %v280
    %v291 = vand.u32 %v268, 65535
    %v292 = vshrl.u32 %v268, 16
    %v293 = vand.u32 %v263, 65535
    %v294 = vshrl.u32 %v263, 16
    %v295 = vmul.u32 %v291, %v293
    %v296 = vmul.u32 %v291, %v294
    %v297 = vmul.u32 %v292, %v293
    %v298 = vmul.u32 %v292, %v294
    %v299 = vshll.u32 %v296, 16
    %v300 = vshrl.u32 %v296, 16
    %v301 = vshll.u32 %v297, 16
    %v302 = vshrl.u32 %v297, 16
    %vm303 = vc.u32 %v295, %v299
    %v304 = vsel %vm303, 1, 0
    %v305 = vadd.s32 %v295, %v299
    %v306 = vadd.s32 %v298, %v304
    %vm307 = vc.u32 %v305, %v301
    %v308 = vsel %vm307, 1, 0
    %v309 = vadd.s32 %v305, %v301
    %v310 = vadd.s32 %v306, %v308
    %v311 = vadd.s32 %v310, %v300
    %v312 = vadd.s32 %v311, %v302
    %v313 = vmul.u32 %v268, %v259
    %v314 = vadd.s32 %v290, %v309
    %vm315 = vc.u32 %v290, %v309
    %v316 = vadd.s32 %v312, 1
    %v317 = vsel %vm315, %v316, %v312
    %v318 = vadd.s32 %v313, %v317
    %v319 = vadd.s32 %v318, 536870912
    %v320 = vshrl.u32 %v319, 30
    %v321 = vshll.u32 %v320, 30
    %v322 = vsub.s32 %v318, %v321
    %vm323 = vcmp.lt.s32.totalorder %v322, 0
    %v324 = vsub.s32 0, %v322
    %v325 = vsel %vm323, %v324, %v322
    %v326 = vclz %v325
    %v327 = vsub.s32 %v326, 2
    %vm328 = vcmp.gt.s32.totalorder 0, %v327
    %v329 = vsel %vm328, 0, %v327
    %v330 = vsub.s32 32, %v329
    %v331 = vshll.u32 %v322, %v329
    %v332 = vshrl.u32 %v314, %v330
    %v333 = vor.u32 %v331, %v332
    %v334 = vsub.s32 4294967266, %v329
    %v335 = vadd.s32 %v334, 127
    %v336 = vshll.u32 %v335, 23
    %v337 = vor.u32 4788187, %v336
    %v338 = vand.u32 2147483647, %v337
    %v340 = vcvt.s32.f32 %v333
    %v341 = vmul.f32 %v340, %v338
    %v342 = vxor.u32 %v341, 2147483648
    %v343 = vsel %vm222, %v342, %v341
    %v344 = vsub.s32 4, %v320
    %v345 = vsel %vm222, %v344, %v320
    %v346 = vsel %vm221, %v65, %v343
    %v347 = vsel %vm221, 0, %v345
    %v348 = vmul.f32 %v346, %v346
    %v349 = vmul.f32 %v348, -0.001358992
    %v350 = vadd.f32 %v349, 0.041655596
    %v351 = vmul.f32 %v348, %v350
    %v352 = vadd.f32 %v351, -0.4999988
    %v353 = vmul.f32 %v348, %v352
    %v354 = vadd.f32 1.0, %v353
    %v355 = vmul.f32 %v346, %v346
    %v356 = vmul.f32 %v355, -0.00019511016
    %v357 = vadd.f32 %v356, 0.008332121
    %v358 = vmul.f32 %v355, %v357
    %v359 = vadd.f32 %v358, -0.16666654
    %v360 = vmul.f32 %v355, %v359
    %v361 = vadd.f32 %v360, 1.0
    %v362 = vmul.f32 %v361, %v346
    %vm363 = vweird.f32 %v65
    %v364 = vand.u32 %v347, 3
    %vm365 = vcmp.lt.s32.totalorder %v364, 2
    %vm366 = vcmp.eq.s32.totalorder %v364, 0
    %v367 = vxor.u32 %v362, 2147483648
    %v368 = vsel %vm366, %v354, %v367
    %vm369 = vcmp.eq.s32.totalorder %v364, 2
    %v370 = vxor.u32 %v354, 2147483648
    %v371 = vsel %vm369, %v370, %v362
    %v372 = vsel %vm365, %v368, %v371
    %v373 = vsel %vm363, nan, %v372
    %374 = vst [vmem:[#allocation7] sm:$0xff] %v219
    %375 = vst [vmem:[#allocation7 + $0x8] sm:$0xff] %v373
    %v376 = vand.u32 2147483647, %v64
    %vm377 = vcmp.le.f32.partialorder %v376, 0.7853982
    %vm378 = vcmp.lt.s32.totalorder %v64, 0
    %v379 = vand.u32 %v64, 2139095040
    %v380 = vshrl.u32 %v379, 23
    %v381 = vsub.s32 %v380, 127
    %v382 = vand.u32 2147483647, %v64
    %v383 = vand.u32 %v382, 8388607
    %v384 = vor.u32 %v383, 8388608
    %v385 = vsub.s32 0, %v384
    %v386 = vadd.s32 %v381, 1
    %vm387 = vcmp.gt.s32.totalorder %v386, 0
    %v388 = vsel %vm387, %v386, 0
    %v389 = vshrl.u32 %v388, 5
    %v390 = vand.u32 %v388, 31
    %v391 = vsub.s32 32, %v390
    %v392 = vshrl.u32 683565275, %v391
    %v393 = vshll.u32 683565275, %v390
    %v394 = vshrl.u32 2475754826, %v391
    %v395 = vor.u32 %v393, %v394
    %v396 = vshll.u32 2475754826, %v390
    %v397 = vshrl.u32 2131351028, %v391
    %v398 = vor.u32 %v396, %v397
    %v399 = vshll.u32 2131351028, %v390
    %v400 = vshrl.u32 2102212464, %v391
    %v401 = vor.u32 %v399, %v400
    %v402 = vshll.u32 2102212464, %v390
    %v403 = vshrl.u32 920167782, %v391
    %v404 = vor.u32 %v402, %v403
    %v405 = vshll.u32 920167782, %v390
    %v406 = vshrl.u32 1326507024, %v391
    %v407 = vor.u32 %v405, %v406
    %vm408 = vcmp.lt.s32.totalorder %v389, 1
    %vm409 = vcmp.lt.s32.totalorder %v389, 2
    %vm410 = vcmp.lt.s32.totalorder %v389, 3
    %vm411 = vcmp.lt.s32.totalorder %v389, 4
    %v412 = vsel %vm408, %v392, %v395
    %v413 = vsel %vm411, %v401, 2102212464
    %v414 = vsel %vm410, %v398, %v413
    %v415 = vsel %vm409, %v412, %v414
    %v416 = vsel %vm408, %v395, %v398
    %v417 = vsel %vm411, %v404, 920167782
    %v418 = vsel %vm410, %v401, %v417
    %v419 = vsel %vm409, %v416, %v418
    %v420 = vsel %vm408, %v398, %v401
    %v421 = vsel %vm411, %v407, 1326507024
    %v422 = vsel %vm410, %v404, %v421
    %v423 = vsel %vm409, %v420, %v422
    %v424 = vshll.u32 %v384, 8
    %v425 = vand.u32 %v424, 65535
    %v426 = vshrl.u32 %v424, 16
    %v427 = vand.u32 %v423, 65535
    %v428 = vshrl.u32 %v423, 16
    %v429 = vmul.u32 %v425, %v427
    %v430 = vmul.u32 %v425, %v428
    %v431 = vmul.u32 %v426, %v427
    %v432 = vmul.u32 %v426, %v428
    %v433 = vshll.u32 %v430, 16
    %v434 = vshrl.u32 %v430, 16
    %v435 = vshll.u32 %v431, 16
    %v436 = vshrl.u32 %v431, 16
    %vm437 = vc.u32 %v429, %v433
    %v438 = vsel %vm437, 1, 0
    %v439 = vadd.s32 %v429, %v433
    %v440 = vadd.s32 %v432, %v438
    %vm441 = vc.u32 %v439, %v435
    %v442 = vsel %vm441, 1, 0
    %v443 = vadd.s32 %v439, %v435
    %v444 = vadd.s32 %v440, %v442
    %v445 = vadd.s32 %v444, %v434
    %v446 = vadd.s32 %v445, %v436
    %v447 = vand.u32 %v424, 65535
    %v448 = vshrl.u32 %v424, 16
    %v449 = vand.u32 %v419, 65535
    %v450 = vshrl.u32 %v419, 16
    %v451 = vmul.u32 %v447, %v449
    %v452 = vmul.u32 %v447, %v450
    %v453 = vmul.u32 %v448, %v449
    %v454 = vmul.u32 %v448, %v450
    %v455 = vshll.u32 %v452, 16
    %v456 = vshrl.u32 %v452, 16
    %v457 = vshll.u32 %v453, 16
    %v458 = vshrl.u32 %v453, 16
    %vm459 = vc.u32 %v451, %v455
    %v460 = vsel %vm459, 1, 0
    %v461 = vadd.s32 %v451, %v455
    %v462 = vadd.s32 %v454, %v460
    %vm463 = vc.u32 %v461, %v457
    %v464 = vsel %vm463, 1, 0
    %v465 = vadd.s32 %v461, %v457
    %v466 = vadd.s32 %v462, %v464
    %v467 = vadd.s32 %v466, %v456
    %v468 = vadd.s32 %v467, %v458
    %v469 = vmul.u32 %v424, %v415
    %v470 = vadd.s32 %v446, %v465
    %vm471 = vc.u32 %v446, %v465
    %v472 = vadd.s32 %v468, 1
    %v473 = vsel %vm471, %v472, %v468
    %v474 = vadd.s32 %v469, %v473
    %v475 = vadd.s32 %v474, 536870912
    %v476 = vshrl.u32 %v475, 30
    %v477 = vshll.u32 %v476, 30
    %v478 = vsub.s32 %v474, %v477
    %vm479 = vcmp.lt.s32.totalorder %v478, 0
    %v480 = vsub.s32 0, %v478
    %v481 = vsel %vm479, %v480, %v478
    %v482 = vclz %v481
    %v483 = vsub.s32 %v482, 2
    %vm484 = vcmp.gt.s32.totalorder 0, %v483
    %v485 = vsel %vm484, 0, %v483
    %v486 = vsub.s32 32, %v485
    %v487 = vshll.u32 %v478, %v485
    %v488 = vshrl.u32 %v470, %v486
    %v489 = vor.u32 %v487, %v488
    %v490 = vsub.s32 4294967266, %v485
    %v491 = vadd.s32 %v490, 127
    %v492 = vshll.u32 %v491, 23
    %v493 = vor.u32 4788187, %v492
    %v494 = vand.u32 2147483647, %v493
    %v496 = vcvt.s32.f32 %v489
    %v497 = vmul.f32 %v496, %v494
    %v498 = vxor.u32 %v497, 2147483648
    %v499 = vsel %vm378, %v498, %v497
    %v500 = vsub.s32 4, %v476
    %v501 = vsel %vm378, %v500, %v476
    %v502 = vsel %vm377, %v64, %v499
    %v503 = vsel %vm377, 0, %v501
    %v504 = vmul.f32 %v502, %v502
    %v505 = vmul.f32 %v504, -0.001358992
    %v506 = vadd.f32 %v505, 0.041655596
    %v507 = vmul.f32 %v504, %v506
    %v508 = vadd.f32 %v507, -0.4999988
    %v509 = vmul.f32 %v504, %v508
    %v510 = vadd.f32 1.0, %v509
    %v511 = vmul.f32 %v502, %v502
    %v512 = vmul.f32 %v511, -0.00019511016
    %v513 = vadd.f32 %v512, 0.008332121
    %v514 = vmul.f32 %v511, %v513
    %v515 = vadd.f32 %v514, -0.16666654
    %v516 = vmul.f32 %v511, %v515
    %v517 = vadd.f32 %v516, 1.0
    %v518 = vmul.f32 %v517, %v502
    %vm519 = vweird.f32 %v64
    %v520 = vadd.s32 %v503, 3
    %v521 = vand.u32 %v520, 3
    %vm522 = vcmp.lt.s32.totalorder %v521, 2
    %vm523 = vcmp.eq.s32.totalorder %v521, 0
    %v524 = vxor.u32 %v518, 2147483648
    %v525 = vsel %vm523, %v510, %v524
    %vm526 = vcmp.eq.s32.totalorder %v521, 2
    %v527 = vxor.u32 %v510, 2147483648
    %v528 = vsel %vm526, %v527, %v518
    %v529 = vsel %vm522, %v525, %v528
    %v530 = vsel %vm519, nan, %v529
    %v531 = vand.u32 2147483647, %v65
    %vm532 = vcmp.le.f32.partialorder %v531, 0.7853982
    %vm533 = vcmp.lt.s32.totalorder %v65, 0
    %v534 = vand.u32 %v65, 2139095040
    %v535 = vshrl.u32 %v534, 23
    %v536 = vsub.s32 %v535, 127
    %v537 = vand.u32 2147483647, %v65
    %v538 = vand.u32 %v537, 8388607
    %v539 = vor.u32 %v538, 8388608
    %v540 = vsub.s32 0, %v539
    %v541 = vadd.s32 %v536, 1
    %vm542 = vcmp.gt.s32.totalorder %v541, 0
    %v543 = vsel %vm542, %v541, 0
    %v544 = vshrl.u32 %v543, 5
    %v545 = vand.u32 %v543, 31
    %v546 = vsub.s32 32, %v545
    %v547 = vshrl.u32 683565275, %v546
    %v548 = vshll.u32 683565275, %v545
    %v549 = vshrl.u32 2475754826, %v546
    %v550 = vor.u32 %v548, %v549
    %v551 = vshll.u32 2475754826, %v545
    %v552 = vshrl.u32 2131351028, %v546
    %v553 = vor.u32 %v551, %v552
    %v554 = vshll.u32 2131351028, %v545
    %v555 = vshrl.u32 2102212464, %v546
    %v556 = vor.u32 %v554, %v555
    %v557 = vshll.u32 2102212464, %v545
    %v558 = vshrl.u32 920167782, %v546
    %v559 = vor.u32 %v557, %v558
    %v560 = vshll.u32 920167782, %v545
    %v561 = vshrl.u32 1326507024, %v546
    %v562 = vor.u32 %v560, %v561
    %vm563 = vcmp.lt.s32.totalorder %v544, 1
    %vm564 = vcmp.lt.s32.totalorder %v544, 2
    %vm565 = vcmp.lt.s32.totalorder %v544, 3
    %vm566 = vcmp.lt.s32.totalorder %v544, 4
    %v567 = vsel %vm563, %v547, %v550
    %v568 = vsel %vm566, %v556, 2102212464
    %v569 = vsel %vm565, %v553, %v568
    %v570 = vsel %vm564, %v567, %v569
    %v571 = vsel %vm563, %v550, %v553
    %v572 = vsel %vm566, %v559, 920167782
    %v573 = vsel %vm565, %v556, %v572
    %v574 = vsel %vm564, %v571, %v573
    %v575 = vsel %vm563, %v553, %v556
    %v576 = vsel %vm566, %v562, 1326507024
    %v577 = vsel %vm565, %v559, %v576
    %v578 = vsel %vm564, %v575, %v577
    %v579 = vshll.u32 %v539, 8
    %v580 = vand.u32 %v579, 65535
    %v581 = vshrl.u32 %v579, 16
    %v582 = vand.u32 %v578, 65535
    %v583 = vshrl.u32 %v578, 16
    %v584 = vmul.u32 %v580, %v582
    %v585 = vmul.u32 %v580, %v583
    %v586 = vmul.u32 %v581, %v582
    %v587 = vmul.u32 %v581, %v583
    %v588 = vshll.u32 %v585, 16
    %v589 = vshrl.u32 %v585, 16
    %v590 = vshll.u32 %v586, 16
    %v591 = vshrl.u32 %v586, 16
    %vm592 = vc.u32 %v584, %v588
    %v593 = vsel %vm592, 1, 0
    %v594 = vadd.s32 %v584, %v588
    %v595 = vadd.s32 %v587, %v593
    %vm596 = vc.u32 %v594, %v590
    %v597 = vsel %vm596, 1, 0
    %v598 = vadd.s32 %v594, %v590
    %v599 = vadd.s32 %v595, %v597
    %v600 = vadd.s32 %v599, %v589
    %v601 = vadd.s32 %v600, %v591
    %v602 = vand.u32 %v579, 65535
    %v603 = vshrl.u32 %v579, 16
    %v604 = vand.u32 %v574, 65535
    %v605 = vshrl.u32 %v574, 16
    %v606 = vmul.u32 %v602, %v604
    %v607 = vmul.u32 %v602, %v605
    %v608 = vmul.u32 %v603, %v604
    %v609 = vmul.u32 %v603, %v605
    %v610 = vshll.u32 %v607, 16
    %v611 = vshrl.u32 %v607, 16
    %v612 = vshll.u32 %v608, 16
    %v613 = vshrl.u32 %v608, 16
    %vm614 = vc.u32 %v606, %v610
    %v615 = vsel %vm614, 1, 0
    %v616 = vadd.s32 %v606, %v610
    %v617 = vadd.s32 %v609, %v615
    %vm618 = vc.u32 %v616, %v612
    %v619 = vsel %vm618, 1, 0
    %v620 = vadd.s32 %v616, %v612
    %v621 = vadd.s32 %v617, %v619
    %v622 = vadd.s32 %v621, %v611
    %v623 = vadd.s32 %v622, %v613
    %v624 = vmul.u32 %v579, %v570
    %v625 = vadd.s32 %v601, %v620
    %vm626 = vc.u32 %v601, %v620
    %v627 = vadd.s32 %v623, 1
    %v628 = vsel %vm626, %v627, %v623
    %v629 = vadd.s32 %v624, %v628
    %v630 = vadd.s32 %v629, 536870912
    %v631 = vshrl.u32 %v630, 30
    %v632 = vshll.u32 %v631, 30
    %v633 = vsub.s32 %v629, %v632
    %vm634 = vcmp.lt.s32.totalorder %v633, 0
    %v635 = vsub.s32 0, %v633
    %v636 = vsel %vm634, %v635, %v633
    %v637 = vclz %v636
    %v638 = vsub.s32 %v637, 2
    %vm639 = vcmp.gt.s32.totalorder 0, %v638
    %v640 = vsel %vm639, 0, %v638
    %v641 = vsub.s32 32, %v640
    %v642 = vshll.u32 %v633, %v640
    %v643 = vshrl.u32 %v625, %v641
    %v644 = vor.u32 %v642, %v643
    %v645 = vsub.s32 4294967266, %v640
    %v646 = vadd.s32 %v645, 127
    %v647 = vshll.u32 %v646, 23
    %v648 = vor.u32 4788187, %v647
    %v649 = vand.u32 2147483647, %v648
    %v651 = vcvt.s32.f32 %v644
    %v652 = vmul.f32 %v651, %v649
    %v653 = vxor.u32 %v652, 2147483648
    %v654 = vsel %vm533, %v653, %v652
    %v655 = vsub.s32 4, %v631
    %v656 = vsel %vm533, %v655, %v631
    %v657 = vsel %vm532, %v65, %v654
    %v658 = vsel %vm532, 0, %v656
    %v659 = vmul.f32 %v657, %v657
    %v660 = vmul.f32 %v659, -0.001358992
    %v661 = vadd.f32 %v660, 0.041655596
    %v662 = vmul.f32 %v659, %v661
    %v663 = vadd.f32 %v662, -0.4999988
    %v664 = vmul.f32 %v659, %v663
    %v665 = vadd.f32 1.0, %v664
    %v666 = vmul.f32 %v657, %v657
    %v667 = vmul.f32 %v666, -0.00019511016
    %v668 = vadd.f32 %v667, 0.008332121
    %v669 = vmul.f32 %v666, %v668
    %v670 = vadd.f32 %v669, -0.16666654
    %v671 = vmul.f32 %v666, %v670
    %v672 = vadd.f32 %v671, 1.0
    %v673 = vmul.f32 %v672, %v657
    %vm674 = vweird.f32 %v65
    %v675 = vadd.s32 %v658, 3
    %v676 = vand.u32 %v675, 3
    %vm677 = vcmp.lt.s32.totalorder %v676, 2
    %vm678 = vcmp.eq.s32.totalorder %v676, 0
    %v679 = vxor.u32 %v673, 2147483648
    %v680 = vsel %vm678, %v665, %v679
    %vm681 = vcmp.eq.s32.totalorder %v676, 2
    %v682 = vxor.u32 %v665, 2147483648
    %v683 = vsel %vm681, %v682, %v673
    %v684 = vsel %vm677, %v680, %v683
    %v685 = vsel %vm674, nan, %v684
    %686 = vst [vmem:[#allocation8] sm:$0xff] %v530
    %687 = vst [vmem:[#allocation8 + $0x8] sm:$0xff] %v685
    // Predicated region
    $region18: #{tpu_custom_call.1} parent=1 // pred_check
      _
    $region19: #{tpu_custom_call.1} parent=1 // pred_check_branch
      %689 = sbr.rel (0) target = $region21
    $region20: #{tpu_custom_call.1} parent=1 // pred_region
      %691 = vsyncadd [#allocation4], 0
      %s692 = sshll.u32 [#allocation7], 4
      %s693 = int_to_ptr.vmem [resolvable:$true] %s692
      %s694 = sshll.u32 %s2, 4
      %s695 = int_to_ptr.hbm [resolvable:$true] %s694
      %700 = dma.vmem_to_hbm [thread:$0]  %s693, 256, %s695, [#allocation4], 128, 128, 8
    $region21: #{tpu_custom_call.1} parent=1 // pred_fallthru
      _
    // Predicated region
    $region22: #{tpu_custom_call.1} parent=1 // pred_check
      _
    $region23: #{tpu_custom_call.1} parent=1 // pred_check_branch
      %702 = sbr.rel (0) target = $region25
    $region24: #{tpu_custom_call.1} parent=1 // pred_region
      %704 = vsyncadd [#allocation9], 0
      %s705 = sshll.u32 [#allocation8], 4
      %s706 = int_to_ptr.vmem [resolvable:$true] %s705
      %s707 = sshll.u32 %s3, 4
      %s708 = int_to_ptr.hbm [resolvable:$true] %s707
      %713 = dma.vmem_to_hbm [thread:$0]  %s706, 256, %s708, [#allocation9], 128, 128, 8
    $region25: #{tpu_custom_call.1} parent=1 // pred_fallthru
      _
    // Predicated region
    $region26: #{tpu_custom_call.1} parent=1 // pred_check
      _
    $region27: #{tpu_custom_call.1} parent=1 // pred_check_branch
      %715 = sbr.rel (0) target = $region29
    $region28: #{tpu_custom_call.1} parent=1 // pred_region
      %717 = dma.done [#allocation4], 256
    $region29: #{tpu_custom_call.1} parent=1 // pred_fallthru
      _
    // Predicated region
    $region30: #{tpu_custom_call.1} parent=1 // pred_check
      _
    $region31: #{tpu_custom_call.1} parent=1 // pred_check_branch
      %719 = sbr.rel (0) target = $region33
    $region32: #{tpu_custom_call.1} parent=1 // pred_region
      %721 = dma.done [#allocation9], 256
    $region33: #{tpu_custom_call.1} parent=1 // pred_fallthru
      _
    %722 = vsyncpa [#allocation3], 1
    %723 = vsyncpa [#allocation6], 1
    %724 = vsyncpa [#allocation4], 1
    %725 = vsyncpa [#allocation9], 1

</llo_original>
